<compile_context>
chip_gen: v7x
topology: tpu7x:2x2x1
jax: 0.10.0
libtpu: 0.0.40
codegen_flags: <defaults>
</compile_context>

<pallas_src>
import jax
import jax.numpy as jnp
from jax import lax
from jax.experimental import pallas as pl
from jax.experimental.pallas import tpu as pltpu

# ---- synthetic config (small) ----
VOCAB = 32
MAX_LEN = 16            # L
DIM_EMBED = 32          # E
NUM_FILTERS = 8         # F
KERNEL_SIZE = (2, 3, 3)
NUM_CLASSES = 4         # C
BATCH = 2               # B

# ---- padded / packed layout constants ----
K_MAX = max(KERNEL_SIZE)                  # 3
F3 = 3 * NUM_FILTERS                      # 24 stacked conv-output columns (branch-major)
F3_PAD = 128                              # lane-dense stacked conv / pooled feature width
C_PAD = 128                               # lane-dense class width for the output store
B_PAD = 8                                 # sublane-aligned batch
T_PAD = 24                                # padded time per example (mult of 8, >= L + K_MAX - 1)
R_ROWS = B_PAD * T_PAD                    # 192 flattened (batch-major) activation rows
R_ALLOC = R_ROWS + 8                      # extra zero rows so dt-shifted slices never read OOB

# weight-slab row layout (all block offsets are multiples of 8 -> clean sublane slices)
W_CBIAS_ROW = K_MAX * DIM_EMBED           # 96  : conv bias row
W_FC_OFF = W_CBIAS_ROW + 8                # 104 : FC weight block (F3_PAD rows, bias in last row)
SLAB_ROWS = W_FC_OFF + F3_PAD             # 232

VALID1 = MAX_LEN - KERNEL_SIZE[0] + 1     # 15 valid time steps, branch 1
VALID23 = MAX_LEN - KERNEL_SIZE[1] + 1    # 14 valid time steps, branches 2 & 3
                                          # (max_pool3 in the module is built from kernel_size[1])


def textcnn_kernel(x_ref, w_ref, out_ref):
    # ---- conv: all three branches fused into one stacked (E, F3_PAD) weight per time offset ----
    # conv[b*T_PAD + t, :] = sum_dt x[b, t+dt, :] @ W[dt]   (branch-1 dt=2 weights are zero)
    acc = jnp.dot(x_ref[pl.ds(0, R_ROWS), :],
                  w_ref[pl.ds(0, DIM_EMBED), :],
                  preferred_element_type=jnp.float32)              # (R_ROWS, F3_PAD)
    for dt in range(1, K_MAX):                                     # static unroll (2 more matmuls)
        acc = acc + jnp.dot(x_ref[pl.ds(dt, R_ROWS), :],
                            w_ref[pl.ds(dt * DIM_EMBED, DIM_EMBED), :],
                            preferred_element_type=jnp.float32)

    # ---- mask invalid time positions per branch, then max-pool over time ----
    acc3 = acc.reshape(B_PAD, T_PAD, F3_PAD)                       # T_PAD % 8 == 0 -> cheap retile
    t_idx = lax.broadcasted_iota(jnp.int32, (T_PAD, F3_PAD), 0)
    c_idx = lax.broadcasted_iota(jnp.int32, (T_PAD, F3_PAD), 1)
    vlen = jnp.where((c_idx >= NUM_FILTERS) & (c_idx < F3), VALID23, VALID1)
    neg = jnp.where(t_idx >= vlen, -1e30, 0.0)                     # (T_PAD, F3_PAD) f32
    pooled = jnp.max(acc3 + neg[None, :, :], axis=1)               # (B_PAD, F3_PAD)

    # ---- conv bias + ReLU AFTER pooling (exact: bias time-invariant, ReLU monotone) ----
    conv_b = w_ref[W_CBIAS_ROW:W_CBIAS_ROW + 1, :]                 # (1, F3_PAD)
    feat = jnp.maximum(pooled + conv_b, 0.0)                       # (B_PAD, F3_PAD)

    # ---- fold FC bias: padded pooled column (F3_PAD-1) := 1.0; bias sits in that weight row ----
    col = lax.broadcasted_iota(jnp.int32, (B_PAD, F3_PAD), 1)
    feat = jnp.where(col == F3_PAD - 1, 1.0, feat)

    # ---- single FC matmul, lane-dense (8, 128) output ----
    fc_w = w_ref[pl.ds(W_FC_OFF, F3_PAD), :]                       # (F3_PAD, C_PAD)
    out_ref[...] = jnp.dot(feat, fc_w, preferred_element_type=jnp.float32)


def pack_params(params):
    """Pack conv weights/biases + permuted FC weight/bias into one (SLAB_ROWS, 128) f32 slab."""
    F, E, C = NUM_FILTERS, DIM_EMBED, NUM_CLASSES
    slab = jnp.zeros((SLAB_ROWS, F3_PAD), jnp.float32)
    for i, k in enumerate(KERNEL_SIZE):
        w = params[f"w{i+1}"]                                      # (F, k, E)
        blk = jnp.transpose(w, (1, 2, 0)).reshape(k * E, F)        # row dt*E+e, col f
        slab = slab.at[:k * E, i * F:(i + 1) * F].set(blk)
        slab = slab.at[W_CBIAS_ROW, i * F:(i + 1) * F].set(params[f"b{i+1}"])
    # PyTorch flatten order: feat[b, f*3 + branch]; pooled order here: column = branch*F + f
    wfc = params["fc_w"].reshape(C, F, 3)                          # (C, f, branch)
    wfc_perm = jnp.transpose(wfc, (2, 1, 0)).reshape(3 * F, C)     # row branch*F+f, col c
    slab = slab.at[W_FC_OFF:W_FC_OFF + 3 * F, :C].set(wfc_perm)
    slab = slab.at[W_FC_OFF + F3_PAD - 1, :C].set(params["fc_b"])  # FC bias row (pooled col==1.0)
    return slab


def pack_activations(emb):
    """(B, L, E) f32 -> zero-padded, flattened (R_ALLOC, E) activation slab."""
    x = jnp.pad(emb, ((0, B_PAD - emb.shape[0]), (0, T_PAD - emb.shape[1]), (0, 0)))
    x = x.reshape(B_PAD * T_PAD, DIM_EMBED)
    return jnp.pad(x, ((0, R_ALLOC - R_ROWS), (0, 0)))


@jax.jit
def textcnn_forward(x_tokens, embedding, w_slab):
    # Embedding gather as JAX glue (tiny here).
    # TODO(synk): at production scale, fuse the gather into the kernel via
    # PrefetchScalarGridSpec (token ids as scalar prefetch + row-gather BlockSpec), add a
    # batch grid with dimension_semantics=("parallel",) and bf16 MXU operands (f32 accum).
    emb = embedding[x_tokens].astype(jnp.float32)                  # (B, L, E)
    x_packed = pack_activations(emb)

    vmem = pl.BlockSpec(memory_space=pltpu.MemorySpace.VMEM)
    out_full = pl.pallas_call(
        textcnn_kernel,
        out_shape=jax.ShapeDtypeStruct((B_PAD, C_PAD), jnp.float32),
        in_specs=[vmem, vmem],
        out_specs=vmem,
    )(x_packed, w_slab)
    return out_full[:BATCH, :NUM_CLASSES]


def init_params(key):
    ks = jax.random.split(key, 9)
    emb = jax.random.normal(ks[0], (VOCAB, DIM_EMBED), jnp.float32) * 0.1
    emb = emb.at[VOCAB - 1].set(0.0)                               # padding_idx row = zeros
    params = {"embedding": emb}
    for i, k in enumerate(KERNEL_SIZE):
        params[f"w{i+1}"] = jax.random.normal(
            ks[1 + i], (NUM_FILTERS, k, DIM_EMBED), jnp.float32) * 0.1
        params[f"b{i+1}"] = jax.random.normal(
            ks[4 + i], (NUM_FILTERS,), jnp.float32) * 0.1
    params["fc_w"] = jax.random.normal(
        ks[7], (NUM_CLASSES, NUM_FILTERS * 3), jnp.float32) * 0.1
    params["fc_b"] = jax.random.normal(ks[8], (NUM_CLASSES,), jnp.float32) * 0.1
    return params


def reference_forward(x_tokens, params):
    # pure-JAX reference mirroring the PyTorch forward exactly
    emb = params["embedding"][x_tokens]                            # (B, L, E)

    def branch(w, b, k):
        L_out = MAX_LEN - k + 1
        cols = []
        for t in range(L_out):
            win = emb[:, t:t + k, :]                               # (B, k, E)
            cols.append(jnp.einsum('bke,fke->bf', win, w) + b)
        y = jnp.stack(cols, axis=1)                                # (B, L_out, F)
        y = jnp.maximum(y, 0.0)
        return jnp.max(y, axis=1)                                  # (B, F)

    p1 = branch(params["w1"], params["b1"], KERNEL_SIZE[0])
    p2 = branch(params["w2"], params["b2"], KERNEL_SIZE[1])
    p3 = branch(params["w3"], params["b3"], KERNEL_SIZE[2])
    # torch.cat((x1,x2,x3), -1).view(B,1,-1) -> filter-major, branch-minor flatten
    feat = jnp.stack([p1, p2, p3], axis=-1).reshape(BATCH, NUM_FILTERS * 3)
    return feat @ params["fc_w"].T + params["fc_b"]


if __name__ == "__main__":
    assert KERNEL_SIZE[1] == KERNEL_SIZE[2], "module requires kernel_size[2] == kernel_size[1]"
    key = jax.random.PRNGKey(0)
    k_param, k_tok = jax.random.split(key)
    params = init_params(k_param)
    x_tokens = jax.random.randint(k_tok, (BATCH, MAX_LEN), 0, VOCAB, dtype=jnp.int32)

    w_slab = pack_params(params)          # packed once, outside the hot path
    out = jax.block_until_ready(textcnn_forward(x_tokens, params["embedding"], w_slab))
    ref = jax.block_until_ready(reference_forward(x_tokens, params))

    assert out.shape == (BATCH, NUM_CLASSES)
    assert jnp.allclose(out, ref, atol=1e-3, rtol=1e-3), (out, ref)
    print("KERNEL_OK")
</pallas_src>

<mosaic_0001>
module attributes {stable_mosaic.version = 11 : i64} {
  func.func @textcnn_kernel(%arg0: memref<200x32xf32, #tpu.memory_space<vmem>>, %arg1: memref<232x128xf32, #tpu.memory_space<vmem>>, %arg2: memref<8x128xf32, #tpu.memory_space<vmem>>) attributes {dimension_semantics = [], scalar_prefetch = 0 : i64, scratch_operands = 0 : i64, tpu.core_type = #tpu.core_type<tc>} {
    %c0 = arith.constant 0 : index
    %c0_0 = arith.constant 0 : index
    %0 = vector.load %arg0[%c0, %c0_0] : memref<200x32xf32, #tpu.memory_space<vmem>>, vector<192x32xf32>
    %c0_1 = arith.constant 0 : index
    %c0_2 = arith.constant 0 : index
    %1 = vector.load %arg1[%c0_1, %c0_2] : memref<232x128xf32, #tpu.memory_space<vmem>>, vector<32x128xf32>
    %cst = arith.constant dense<0.000000e+00> : vector<192x128xf32>
    %2 = tpu.matmul %0, %1, %cst {dimension_numbers = #tpu.dot_dimension_numbers<[1], [0], [0], [1], [0, 0, 1, 1], [], []>} : vector<192x32xf32>, vector<32x128xf32>, vector<192x128xf32> -> vector<192x128xf32>
    %c1 = arith.constant 1 : index
    %c0_3 = arith.constant 0 : index
    %3 = vector.load %arg0[%c1, %c0_3] : memref<200x32xf32, #tpu.memory_space<vmem>>, vector<192x32xf32>
    %c32 = arith.constant 32 : index
    %c0_4 = arith.constant 0 : index
    %4 = vector.load %arg1[%c32, %c0_4] : memref<232x128xf32, #tpu.memory_space<vmem>>, vector<32x128xf32>
    %cst_5 = arith.constant dense<0.000000e+00> : vector<192x128xf32>
    %5 = tpu.matmul %3, %4, %cst_5 {dimension_numbers = #tpu.dot_dimension_numbers<[1], [0], [0], [1], [0, 0, 1, 1], [], []>} : vector<192x32xf32>, vector<32x128xf32>, vector<192x128xf32> -> vector<192x128xf32>
    %6 = arith.addf %2, %5 : vector<192x128xf32>
    %c2 = arith.constant 2 : index
    %c0_6 = arith.constant 0 : index
    %7 = vector.load %arg0[%c2, %c0_6] : memref<200x32xf32, #tpu.memory_space<vmem>>, vector<192x32xf32>
    %c64 = arith.constant 64 : index
    %c0_7 = arith.constant 0 : index
    %8 = vector.load %arg1[%c64, %c0_7] : memref<232x128xf32, #tpu.memory_space<vmem>>, vector<32x128xf32>
    %cst_8 = arith.constant dense<0.000000e+00> : vector<192x128xf32>
    %9 = tpu.matmul %7, %8, %cst_8 {dimension_numbers = #tpu.dot_dimension_numbers<[1], [0], [0], [1], [0, 0, 1, 1], [], []>} : vector<192x32xf32>, vector<32x128xf32>, vector<192x128xf32> -> vector<192x128xf32>
    %10 = arith.addf %6, %9 : vector<192x128xf32>
    %11 = vector.shape_cast %10 : vector<192x128xf32> to vector<8x24x128xf32>
    %12 = tpu.iota {dimensions = array<i32: 0>} : vector<24x128xi32>
    %13 = tpu.iota {dimensions = array<i32: 1>} : vector<24x128xi32>
    %c8_i32 = arith.constant 8 : i32
    %14 = vector.broadcast %c8_i32 : i32 to vector<24x128xi32>
    %15 = arith.cmpi sge, %13, %14 : vector<24x128xi32>
    %c24_i32 = arith.constant 24 : i32
    %16 = vector.broadcast %c24_i32 : i32 to vector<24x128xi32>
    %17 = arith.cmpi slt, %13, %16 : vector<24x128xi32>
    %18 = arith.andi %15, %17 : vector<24x128xi1>
    %c14_i32 = arith.constant 14 : i32
    %c15_i32 = arith.constant 15 : i32
    %19 = vector.broadcast %c14_i32 : i32 to vector<24x128xi32>
    %20 = vector.broadcast %c15_i32 : i32 to vector<24x128xi32>
    %21 = arith.select %18, %19, %20 : vector<24x128xi1>, vector<24x128xi32>
    %22 = arith.cmpi sge, %12, %21 : vector<24x128xi32>
    %cst_9 = arith.constant -1.000000e+30 : f32
    %cst_10 = arith.constant 0.000000e+00 : f32
    %23 = vector.broadcast %cst_9 : f32 to vector<24x128xf32>
    %24 = vector.broadcast %cst_10 : f32 to vector<24x128xf32>
    %25 = arith.select %22, %23, %24 : vector<24x128xi1>, vector<24x128xf32>
    %26 = vector.shape_cast %25 : vector<24x128xf32> to vector<1x24x128xf32>
    %27 = vector.broadcast %26 : vector<1x24x128xf32> to vector<8x24x128xf32>
    %28 = arith.addf %11, %27 : vector<8x24x128xf32>
    %cst_11 = arith.constant dense<0xFF800000> : vector<8x128xf32>
    %29 = vector.multi_reduction <maximumf>, %28, %cst_11 [1] : vector<8x24x128xf32> to vector<8x128xf32>
    %c96 = arith.constant 96 : index
    %c0_12 = arith.constant 0 : index
    %30 = vector.load %arg1[%c96, %c0_12] : memref<232x128xf32, #tpu.memory_space<vmem>>, vector<1x128xf32>
    %31 = vector.broadcast %30 : vector<1x128xf32> to vector<8x128xf32>
    %32 = arith.addf %29, %31 : vector<8x128xf32>
    %cst_13 = arith.constant 0.000000e+00 : f32
    %33 = vector.broadcast %cst_13 : f32 to vector<8x128xf32>
    %34 = arith.maximumf %32, %33 : vector<8x128xf32>
    %35 = tpu.iota {dimensions = array<i32: 1>} : vector<8x128xi32>
    %c127_i32 = arith.constant 127 : i32
    %36 = vector.broadcast %c127_i32 : i32 to vector<8x128xi32>
    %37 = arith.cmpi eq, %35, %36 : vector<8x128xi32>
    %cst_14 = arith.constant 1.000000e+00 : f32
    %38 = vector.broadcast %cst_14 : f32 to vector<8x128xf32>
    %39 = arith.select %37, %38, %34 : vector<8x128xi1>, vector<8x128xf32>
    %c104 = arith.constant 104 : index
    %c0_15 = arith.constant 0 : index
    %40 = vector.load %arg1[%c104, %c0_15] : memref<232x128xf32, #tpu.memory_space<vmem>>, vector<128x128xf32>
    %cst_16 = arith.constant dense<0.000000e+00> : vector<8x128xf32>
    %41 = tpu.matmul %39, %40, %cst_16 {dimension_numbers = #tpu.dot_dimension_numbers<[1], [0], [0], [1], [0, 0, 1, 1], [], []>} : vector<8x128xf32>, vector<128x128xf32>, vector<8x128xf32> -> vector<8x128xf32>
    %c0_17 = arith.constant 0 : index
    %c0_18 = arith.constant 0 : index
    %42 = vector.load %arg2[%c0_17, %c0_18] : memref<8x128xf32, #tpu.memory_space<vmem>>, vector<8x128xf32>
    tpu.vector_store %arg2[%c0_17, %c0_18], %41 {strides = array<i32>} : memref<8x128xf32, #tpu.memory_space<vmem>>, vector<8x128xf32>,
    return
  }
}

</mosaic_0001>

<llo_original>
// kernel: textcnn_forward.1
$region0: #{textcnn_forward.1}
  #allocation0 [shape = 'u32[]', space=smem, size = 0x4, offset = 0x4, fixed_abs, tag = 'smem constant byte address 0x4 - core index']
  #allocation1 [shape = 'u32[144,128]{1,0:T(1,128)}', space=vmem, size = 0x12000, scoped, tag = 'internal scratch']
  %s0 = inlined_call_operand.vmem [shape: f32[200,32], index: 0, kind: input, shape index: {}]
  %s1 = inlined_call_operand.vmem [shape: f32[232,128], index: 1, kind: input, shape index: {}]
  %s2 = inlined_call_operand.vmem [shape: f32[8,128], index: 2, kind: output, shape index: {}]
  %s3 = sld [smem:[#allocation0]]
  $region18: #{textcnn_forward.1} parent=0
    _
  %s5 = ssub.s32 1, %s3
  %s6 = scalar_select 0, %s5, %s3
  // Predicated region
  $region2: #{textcnn_forward.1} parent=0 // pred_check
    _
  $region3: #{textcnn_forward.1} parent=0 // pred_check_branch
    %8 = sbr.rel (0) target = $region5
  $region4: #{textcnn_forward.1} parent=0 // pred_region
    _
  $region5: #{textcnn_forward.1} parent=0 // pred_fallthru
    _
  // Predicated region
  $region6: #{textcnn_forward.1} parent=0 // pred_check
    _
  $region7: #{textcnn_forward.1} parent=0 // pred_check_branch
    %10 = sbr.rel (0) target = $region9
  $region8: #{textcnn_forward.1} parent=0 // pred_region
    _
  $region9: #{textcnn_forward.1} parent=0 // pred_fallthru
    _
  %v11 = vld [vmem:[%s0] sm:$0xff]
  %v12 = vld [vmem:[%s0 + $0x8] sm:$0xff]
  %v13 = vld [vmem:[%s0 + $0x10] sm:$0xff]
  %v14 = vld [vmem:[%s0 + $0x18] sm:$0xff]
  %v15 = vld [vmem:[%s0 + $0x20] sm:$0xff]
  %v16 = vld [vmem:[%s0 + $0x28] sm:$0xff]
  %v17 = vld [vmem:[%s0 + $0x30] sm:$0xff]
  %v18 = vld [vmem:[%s0 + $0x38] sm:$0xff]
  %v19 = vld [vmem:[%s0 + $0x40] sm:$0xff]
  %v20 = vld [vmem:[%s0 + $0x48] sm:$0xff]
  %v21 = vld [vmem:[%s0 + $0x50] sm:$0xff]
  %v22 = vld [vmem:[%s0 + $0x58] sm:$0xff]
  %v23 = vld [vmem:[%s0 + $0x60] sm:$0xff]
  %v24 = vld [vmem:[%s0 + $0x68] sm:$0xff]
  %v25 = vld [vmem:[%s0 + $0x70] sm:$0xff]
  %v26 = vld [vmem:[%s0 + $0x78] sm:$0xff]
  %v27 = vld [vmem:[%s0 + $0x80] sm:$0xff]
  %v28 = vld [vmem:[%s0 + $0x88] sm:$0xff]
  %v29 = vld [vmem:[%s0 + $0x90] sm:$0xff]
  %v30 = vld [vmem:[%s0 + $0x98] sm:$0xff]
  %v31 = vld [vmem:[%s0 + $0xa0] sm:$0xff]
  %v32 = vld [vmem:[%s0 + $0xa8] sm:$0xff]
  %v33 = vld [vmem:[%s0 + $0xb0] sm:$0xff]
  %v34 = vld [vmem:[%s0 + $0xb8] sm:$0xff]
  %v35 = vld [vmem:[%s1] sm:$0xff]
  %v36 = vld [vmem:[%s1 + $0x8] sm:$0xff]
  %v37 = vld [vmem:[%s1 + $0x10] sm:$0xff]
  %v38 = vld [vmem:[%s1 + $0x18] sm:$0xff]
  %v39 = vld [vmem:[%s0 + $0x1] sm:$0xff]
  %v40 = vld [vmem:[%s0 + $0x9] sm:$0xff]
  %v41 = vld [vmem:[%s0 + $0x11] sm:$0xff]
  %v42 = vld [vmem:[%s0 + $0x19] sm:$0xff]
  %v43 = vld [vmem:[%s0 + $0x21] sm:$0xff]
  %v44 = vld [vmem:[%s0 + $0x29] sm:$0xff]
  %v45 = vld [vmem:[%s0 + $0x31] sm:$0xff]
  %v46 = vld [vmem:[%s0 + $0x39] sm:$0xff]
  %v47 = vld [vmem:[%s0 + $0x41] sm:$0xff]
  %v48 = vld [vmem:[%s0 + $0x49] sm:$0xff]
  %v49 = vld [vmem:[%s0 + $0x51] sm:$0xff]
  %v50 = vld [vmem:[%s0 + $0x59] sm:$0xff]
  %v51 = vld [vmem:[%s0 + $0x61] sm:$0xff]
  %v52 = vld [vmem:[%s0 + $0x69] sm:$0xff]
  %v53 = vld [vmem:[%s0 + $0x71] sm:$0xff]
  %v54 = vld [vmem:[%s0 + $0x79] sm:$0xff]
  %v55 = vld [vmem:[%s0 + $0x81] sm:$0xff]
  %v56 = vld [vmem:[%s0 + $0x89] sm:$0xff]
  %v57 = vld [vmem:[%s0 + $0x91] sm:$0xff]
  %v58 = vld [vmem:[%s0 + $0x99] sm:$0xff]
  %v59 = vld [vmem:[%s0 + $0xa1] sm:$0xff]
  %v60 = vld [vmem:[%s0 + $0xa9] sm:$0xff]
  %v61 = vld [vmem:[%s0 + $0xb1] sm:$0xff]
  %v62 = vld [vmem:[%s0 + $0xb9] sm:$0xff]
  %v63 = vld [vmem:[%s1 + $0x20] sm:$0xff]
  %v64 = vld [vmem:[%s1 + $0x28] sm:$0xff]
  %v65 = vld [vmem:[%s1 + $0x30] sm:$0xff]
  %v66 = vld [vmem:[%s1 + $0x38] sm:$0xff]
  %vm67 = vcmask 261120
  %v69 = vsel %vm67, %v39, 0
  %v72 = vsel %vm67, %v40, 0
  %v75 = vsel %vm67, %v41, 0
  %v78 = vsel %vm67, %v42, 0
  %v81 = vsel %vm67, %v43, 0
  %v84 = vsel %vm67, %v44, 0
  %v87 = vsel %vm67, %v45, 0
  %v90 = vsel %vm67, %v46, 0
  %v93 = vsel %vm67, %v47, 0
  %v96 = vsel %vm67, %v48, 0
  %v99 = vsel %vm67, %v49, 0
  %v102 = vsel %vm67, %v50, 0
  %v105 = vsel %vm67, %v51, 0
  %v108 = vsel %vm67, %v52, 0
  %v111 = vsel %vm67, %v53, 0
  %v114 = vsel %vm67, %v54, 0
  %v117 = vsel %vm67, %v55, 0
  %v120 = vsel %vm67, %v56, 0
  %v123 = vsel %vm67, %v57, 0
  %v126 = vsel %vm67, %v58, 0
  %v129 = vsel %vm67, %v59, 0
  %v132 = vsel %vm67, %v60, 0
  %v135 = vsel %vm67, %v61, 0
  %v138 = vsel %vm67, %v62, 0
  %140 = vmatprep.subr.mxu0 0.0
  %141 = vmatpush1.msra.mxu0 %v63
  %142 = vmatprep.subr.mxu0 0.0
  %143 = vmatpush1.msra.mxu0 %v64
  %144 = vmatprep.subr.mxu0 0.0
  %145 = vmatpush1.msra.mxu0 %v65
  %146 = vmatprep.subr.mxu0 0.0
  %147 = vmatpush1.msra.mxu0 %v66
  %148 = vmatprep.subr.mxu0 0.0
  %149 = vmatpush1.msra.mxu0 0.0
  %150 = vmatprep.subr.mxu0 0.0
  %151 = vmatpush1.msra.mxu0 0.0
  %152 = vmatprep.subr.mxu0 0.0
  %153 = vmatpush1.msra.mxu0 0.0
  %154 = vmatprep.subr.mxu0 0.0
  %155 = vmatpush1.msra.mxu0 0.0
  %156 = vmatprep.subr.mxu0 0.0
  %157 = vmatpush1.msra.mxu0 0.0
  %158 = vmatprep.subr.mxu0 0.0
  %159 = vmatpush1.msra.mxu0 0.0
  %160 = vmatprep.subr.mxu0 0.0
  %161 = vmatpush1.msra.mxu0 0.0
  %162 = vmatprep.subr.mxu0 0.0
  %163 = vmatpush1.msra.mxu0 0.0
  %164 = vmatprep.subr.mxu0 0.0
  %165 = vmatpush1.msra.mxu0 0.0
  %166 = vmatprep.subr.mxu0 0.0
  %167 = vmatpush1.msra.mxu0 0.0
  %168 = vmatprep.subr.mxu0 0.0
  %169 = vmatpush1.msra.mxu0 0.0
  %170 = vmatprep.subr.mxu0 0.0
  %171 = vmatpush1.msra.mxu0 0.0
  %172 = vmatprep.subr.mxu0 0.0
  %173 = vmatpush1.msra.mxu0 0.0
  %174 = vmatprep.subr.mxu0 0.0
  %175 = vmatpush1.msra.mxu0 0.0
  %176 = vmatprep.subr.mxu0 0.0
  %177 = vmatpush1.msra.mxu0 0.0
  %178 = vmatprep.subr.mxu0 0.0
  %179 = vmatpush1.msra.mxu0 0.0
  %180 = vmatprep.subr.mxu0 0.0
  %181 = vmatpush1.msra.mxu0 0.0
  %182 = vmatprep.subr.mxu0 0.0
  %183 = vmatpush1.msra.mxu0 0.0
  %184 = vmatprep.subr.mxu0 0.0
  %185 = vmatpush1.msra.mxu0 0.0
  %186 = vmatprep.subr.mxu0 0.0
  %187 = vmatpush1.msra.mxu0 0.0
  %188 = vmatprep.subr.mxu0 0.0
  %189 = vmatpush1.msra.mxu0 0.0
  %190 = vmatprep.subr.mxu0 0.0
  %191 = vmatpush1.msra.mxu0 0.0
  %192 = vmatprep.subr.mxu0 0.0
  %193 = vmatpush1.msra.mxu0 0.0
  %194 = vmatprep.subr.mxu0 0.0
  %195 = vmatpush1.msra.mxu0 0.0
  %196 = vmatprep.subr.mxu0 0.0
  %197 = vmatpush1.msra.mxu0 0.0
  %198 = vmatprep.subr.mxu0 0.0
  %199 = vmatpush1.msra.mxu0 0.0
  %200 = vmatprep.subr.mxu0 0.0
  %201 = vmatpush1.msra.mxu0 0.0
  %202 = vmatprep.subr.mxu0 0.0
  %203 = vmatpush1.msra.mxu0 0.0
  %204 = vmatprep.mubr.f32.mxu0 0.0
  %205 = vmatmul.mubr.f32.gmra.mrb[0].mxu0 %v69
  %v206 = vpop.f32.mrb[0].mxu0
  %v207 = vadd.f32 0.0, %v206
  %v208 = vpop.f32.mrb[0].mxu0
  %209 = vmatprep.mubr.f32.mxu0 0.0
  %210 = vmatmul.mubr.f32.gmra.mrb[0].mxu0 %v72
  %v211 = vpop.f32.mrb[0].mxu0
  %v212 = vadd.f32 0.0, %v211
  %v213 = vpop.f32.mrb[0].mxu0
  %214 = vmatprep.mubr.f32.mxu0 0.0
  %215 = vmatmul.mubr.f32.gmra.mrb[0].mxu0 %v75
  %v216 = vpop.f32.mrb[0].mxu0
  %v217 = vadd.f32 0.0, %v216
  %v218 = vpop.f32.mrb[0].mxu0
  %219 = vmatprep.mubr.f32.mxu0 0.0
  %220 = vmatmul.mubr.f32.gmra.mrb[0].mxu0 %v78
  %v221 = vpop.f32.mrb[0].mxu0
  %v222 = vadd.f32 0.0, %v221
  %v223 = vpop.f32.mrb[0].mxu0
  %224 = vmatprep.mubr.f32.mxu0 0.0
  %225 = vmatmul.mubr.f32.gmra.mrb[0].mxu0 %v81
  %v226 = vpop.f32.mrb[0].mxu0
  %v227 = vadd.f32 0.0, %v226
  %v228 = vpop.f32.mrb[0].mxu0
  %229 = vmatprep.mubr.f32.mxu0 0.0
  %230 = vmatmul.mubr.f32.gmra.mrb[0].mxu0 %v84
  %v231 = vpop.f32.mrb[0].mxu0
  %v232 = vadd.f32 0.0, %v231
  %v233 = vpop.f32.mrb[0].mxu0
  %234 = vmatprep.mubr.f32.mxu0 0.0
  %235 = vmatmul.mubr.f32.gmra.mrb[0].mxu0 %v87
  %v236 = vpop.f32.mrb[0].mxu0
  %v237 = vadd.f32 0.0, %v236
  %v238 = vpop.f32.mrb[0].mxu0
  %239 = vmatprep.mubr.f32.mxu0 0.0
  %240 = vmatmul.mubr.f32.gmra.mrb[0].mxu0 %v90
  %v241 = vpop.f32.mrb[0].mxu0
  %v242 = vadd.f32 0.0, %v241
  %v243 = vpop.f32.mrb[0].mxu0
  %244 = vmatprep.mubr.f32.mxu0 0.0
  %245 = vmatmul.mubr.f32.gmra.mrb[0].mxu0 %v93
  %v246 = vpop.f32.mrb[0].mxu0
  %v247 = vadd.f32 0.0, %v246
  %v248 = vpop.f32.mrb[0].mxu0
  %249 = vmatprep.mubr.f32.mxu0 0.0
  %250 = vmatmul.mubr.f32.gmra.mrb[0].mxu0 %v96
  %v251 = vpop.f32.mrb[0].mxu0
  %v252 = vadd.f32 0.0, %v251
  %v253 = vpop.f32.mrb[0].mxu0
  %254 = vmatprep.mubr.f32.mxu0 0.0
  %255 = vmatmul.mubr.f32.gmra.mrb[0].mxu0 %v99
  %v256 = vpop.f32.mrb[0].mxu0
  %v257 = vadd.f32 0.0, %v256
  %v258 = vpop.f32.mrb[0].mxu0
  %259 = vmatprep.mubr.f32.mxu0 0.0
  %260 = vmatmul.mubr.f32.gmra.mrb[0].mxu0 %v102
  %v261 = vpop.f32.mrb[0].mxu0
  %v262 = vadd.f32 0.0, %v261
  %v263 = vpop.f32.mrb[0].mxu0
  %264 = vmatprep.mubr.f32.mxu0 0.0
  %265 = vmatmul.mubr.f32.gmra.mrb[0].mxu0 %v105
  %v266 = vpop.f32.mrb[0].mxu0
  %v267 = vadd.f32 0.0, %v266
  %v268 = vpop.f32.mrb[0].mxu0
  %269 = vmatprep.mubr.f32.mxu0 0.0
  %270 = vmatmul.mubr.f32.gmra.mrb[0].mxu0 %v108
  %v271 = vpop.f32.mrb[0].mxu0
  %v272 = vadd.f32 0.0, %v271
  %v273 = vpop.f32.mrb[0].mxu0
  %274 = vmatprep.mubr.f32.mxu0 0.0
  %275 = vmatmul.mubr.f32.gmra.mrb[0].mxu0 %v111
  %v276 = vpop.f32.mrb[0].mxu0
  %v277 = vadd.f32 0.0, %v276
  %v278 = vpop.f32.mrb[0].mxu0
  %279 = vmatprep.mubr.f32.mxu0 0.0
  %280 = vmatmul.mubr.f32.gmra.mrb[0].mxu0 %v114
  %v281 = vpop.f32.mrb[0].mxu0
  %v282 = vadd.f32 0.0, %v281
  %v283 = vpop.f32.mrb[0].mxu0
  %284 = vmatprep.mubr.f32.mxu0 0.0
  %285 = vmatmul.mubr.f32.gmra.mrb[0].mxu0 %v117
  %v286 = vpop.f32.mrb[0].mxu0
  %v287 = vadd.f32 0.0, %v286
  %v288 = vpop.f32.mrb[0].mxu0
  %289 = vmatprep.mubr.f32.mxu0 0.0
  %290 = vmatmul.mubr.f32.gmra.mrb[0].mxu0 %v120
  %v291 = vpop.f32.mrb[0].mxu0
  %v292 = vadd.f32 0.0, %v291
  %v293 = vpop.f32.mrb[0].mxu0
  %294 = vmatprep.mubr.f32.mxu0 0.0
  %295 = vmatmul.mubr.f32.gmra.mrb[0].mxu0 %v123
  %v296 = vpop.f32.mrb[0].mxu0
  %v297 = vadd.f32 0.0, %v296
  %v298 = vpop.f32.mrb[0].mxu0
  %299 = vmatprep.mubr.f32.mxu0 0.0
  %300 = vmatmul.mubr.f32.gmra.mrb[0].mxu0 %v126
  %v301 = vpop.f32.mrb[0].mxu0
  %v302 = vadd.f32 0.0, %v301
  %v303 = vpop.f32.mrb[0].mxu0
  %304 = vmatprep.mubr.f32.mxu0 0.0
  %305 = vmatmul.mubr.f32.gmra.mrb[0].mxu0 %v129
  %v306 = vpop.f32.mrb[0].mxu0
  %v307 = vadd.f32 0.0, %v306
  %v308 = vpop.f32.mrb[0].mxu0
  %309 = vmatprep.mubr.f32.mxu0 0.0
  %310 = vmatmul.mubr.f32.gmra.mrb[0].mxu0 %v132
  %v311 = vpop.f32.mrb[0].mxu0
  %v312 = vadd.f32 0.0, %v311
  %v313 = vpop.f32.mrb[0].mxu0
  %314 = vmatprep.mubr.f32.mxu0 0.0
  %315 = vmatmul.mubr.f32.gmra.mrb[0].mxu0 %v135
  %v316 = vpop.f32.mrb[0].mxu0
  %v317 = vadd.f32 0.0, %v316
  %v318 = vpop.f32.mrb[0].mxu0
  %319 = vmatprep.mubr.f32.mxu0 0.0
  %320 = vmatmul.mubr.f32.gmra.mrb[0].mxu0 %v138
  %v321 = vpop.f32.mrb[0].mxu0
  %v322 = vadd.f32 0.0, %v321
  %v323 = vpop.f32.mrb[0].mxu0
  %324 = vdwg.mxu0
  %v326 = vsel %vm67, %v11, 0
  %v329 = vsel %vm67, %v12, 0
  %v332 = vsel %vm67, %v13, 0
  %v335 = vsel %vm67, %v14, 0
  %v338 = vsel %vm67, %v15, 0
  %v341 = vsel %vm67, %v16, 0
  %v344 = vsel %vm67, %v17, 0
  %v347 = vsel %vm67, %v18, 0
  %v350 = vsel %vm67, %v19, 0
  %v353 = vsel %vm67, %v20, 0
  %v356 = vsel %vm67, %v21, 0
  %v359 = vsel %vm67, %v22, 0
  %v362 = vsel %vm67, %v23, 0
  %v365 = vsel %vm67, %v24, 0
  %v368 = vsel %vm67, %v25, 0
  %v371 = vsel %vm67, %v26, 0
  %v374 = vsel %vm67, %v27, 0
  %v377 = vsel %vm67, %v28, 0
  %v380 = vsel %vm67, %v29, 0
  %v383 = vsel %vm67, %v30, 0
  %v386 = vsel %vm67, %v31, 0
  %v389 = vsel %vm67, %v32, 0
  %v392 = vsel %vm67, %v33, 0
  %v395 = vsel %vm67, %v34, 0
  %397 = vmatprep.subr.mxu0 0.0
  %398 = vmatpush1.msra.mxu0 %v35
  %399 = vmatprep.subr.mxu0 0.0
  %400 = vmatpush1.msra.mxu0 %v36
  %401 = vmatprep.subr.mxu0 0.0
  %402 = vmatpush1.msra.mxu0 %v37
  %403 = vmatprep.subr.mxu0 0.0
  %404 = vmatpush1.msra.mxu0 %v38
  %405 = vmatprep.subr.mxu0 0.0
  %406 = vmatpush1.msra.mxu0 0.0
  %407 = vmatprep.subr.mxu0 0.0
  %408 = vmatpush1.msra.mxu0 0.0
  %409 = vmatprep.subr.mxu0 0.0
  %410 = vmatpush1.msra.mxu0 0.0
  %411 = vmatprep.subr.mxu0 0.0
  %412 = vmatpush1.msra.mxu0 0.0
  %413 = vmatprep.subr.mxu0 0.0
  %414 = vmatpush1.msra.mxu0 0.0
  %415 = vmatprep.subr.mxu0 0.0
  %416 = vmatpush1.msra.mxu0 0.0
  %417 = vmatprep.subr.mxu0 0.0
  %418 = vmatpush1.msra.mxu0 0.0
  %419 = vmatprep.subr.mxu0 0.0
  %420 = vmatpush1.msra.mxu0 0.0
  %421 = vmatprep.subr.mxu0 0.0
  %422 = vmatpush1.msra.mxu0 0.0
  %423 = vmatprep.subr.mxu0 0.0
  %424 = vmatpush1.msra.mxu0 0.0
  %425 = vmatprep.subr.mxu0 0.0
  %426 = vmatpush1.msra.mxu0 0.0
  %427 = vmatprep.subr.mxu0 0.0
  %428 = vmatpush1.msra.mxu0 0.0
  %429 = vmatprep.subr.mxu0 0.0
  %430 = vmatpush1.msra.mxu0 0.0
  %431 = vmatprep.subr.mxu0 0.0
  %432 = vmatpush1.msra.mxu0 0.0
  %433 = vmatprep.subr.mxu0 0.0
  %434 = vmatpush1.msra.mxu0 0.0
  %435 = vmatprep.subr.mxu0 0.0
  %436 = vmatpush1.msra.mxu0 0.0
  %437 = vmatprep.subr.mxu0 0.0
  %438 = vmatpush1.msra.mxu0 0.0
  %439 = vmatprep.subr.mxu0 0.0
  %440 = vmatpush1.msra.mxu0 0.0
  %441 = vmatprep.subr.mxu0 0.0
  %442 = vmatpush1.msra.mxu0 0.0
  %443 = vmatprep.subr.mxu0 0.0
  %444 = vmatpush1.msra.mxu0 0.0
  %445 = vmatprep.subr.mxu0 0.0
  %446 = vmatpush1.msra.mxu0 0.0
  %447 = vmatprep.subr.mxu0 0.0
  %448 = vmatpush1.msra.mxu0 0.0
  %449 = vmatprep.subr.mxu0 0.0
  %450 = vmatpush1.msra.mxu0 0.0
  %451 = vmatprep.subr.mxu0 0.0
  %452 = vmatpush1.msra.mxu0 0.0
  %453 = vmatprep.subr.mxu0 0.0
  %454 = vmatpush1.msra.mxu0 0.0
  %455 = vmatprep.subr.mxu0 0.0
  %456 = vmatpush1.msra.mxu0 0.0
  %457 = vmatprep.subr.mxu0 0.0
  %458 = vmatpush1.msra.mxu0 0.0
  %459 = vmatprep.subr.mxu0 0.0
  %460 = vmatpush1.msra.mxu0 0.0
  %461 = vmatprep.mubr.f32.mxu0 0.0
  %462 = vmatmul.mubr.f32.gmra.mrb[0].mxu0 %v326
  %v463 = vpop.f32.mrb[0].mxu0
  %v464 = vadd.f32 %v207, %v463
  %v465 = vpop.f32.mrb[0].mxu0
  %466 = vmatprep.mubr.f32.mxu0 0.0
  %467 = vmatmul.mubr.f32.gmra.mrb[0].mxu0 %v329
  %v468 = vpop.f32.mrb[0].mxu0
  %v469 = vadd.f32 %v212, %v468
  %v470 = vpop.f32.mrb[0].mxu0
  %471 = vmatprep.mubr.f32.mxu0 0.0
  %472 = vmatmul.mubr.f32.gmra.mrb[0].mxu0 %v332
  %v473 = vpop.f32.mrb[0].mxu0
  %v474 = vadd.f32 %v217, %v473
  %v475 = vpop.f32.mrb[0].mxu0
  %476 = vmatprep.mubr.f32.mxu0 0.0
  %477 = vmatmul.mubr.f32.gmra.mrb[0].mxu0 %v335
  %v478 = vpop.f32.mrb[0].mxu0
  %v479 = vadd.f32 %v222, %v478
  %v480 = vpop.f32.mrb[0].mxu0
  %481 = vmatprep.mubr.f32.mxu0 0.0
  %482 = vmatmul.mubr.f32.gmra.mrb[0].mxu0 %v338
  %v483 = vpop.f32.mrb[0].mxu0
  %v484 = vadd.f32 %v227, %v483
  %v485 = vpop.f32.mrb[0].mxu0
  %486 = vmatprep.mubr.f32.mxu0 0.0
  %487 = vmatmul.mubr.f32.gmra.mrb[0].mxu0 %v341
  %v488 = vpop.f32.mrb[0].mxu0
  %v489 = vadd.f32 %v232, %v488
  %v490 = vpop.f32.mrb[0].mxu0
  %491 = vmatprep.mubr.f32.mxu0 0.0
  %492 = vmatmul.mubr.f32.gmra.mrb[0].mxu0 %v344
  %v493 = vpop.f32.mrb[0].mxu0
  %v494 = vadd.f32 %v237, %v493
  %v495 = vpop.f32.mrb[0].mxu0
  %496 = vmatprep.mubr.f32.mxu0 0.0
  %497 = vmatmul.mubr.f32.gmra.mrb[0].mxu0 %v347
  %v498 = vpop.f32.mrb[0].mxu0
  %v499 = vadd.f32 %v242, %v498
  %v500 = vpop.f32.mrb[0].mxu0
  %501 = vmatprep.mubr.f32.mxu0 0.0
  %502 = vmatmul.mubr.f32.gmra.mrb[0].mxu0 %v350
  %v503 = vpop.f32.mrb[0].mxu0
  %v504 = vadd.f32 %v247, %v503
  %v505 = vpop.f32.mrb[0].mxu0
  %506 = vmatprep.mubr.f32.mxu0 0.0
  %507 = vmatmul.mubr.f32.gmra.mrb[0].mxu0 %v353
  %v508 = vpop.f32.mrb[0].mxu0
  %v509 = vadd.f32 %v252, %v508
  %v510 = vpop.f32.mrb[0].mxu0
  %511 = vmatprep.mubr.f32.mxu0 0.0
  %512 = vmatmul.mubr.f32.gmra.mrb[0].mxu0 %v356
  %v513 = vpop.f32.mrb[0].mxu0
  %v514 = vadd.f32 %v257, %v513
  %v515 = vpop.f32.mrb[0].mxu0
  %516 = vmatprep.mubr.f32.mxu0 0.0
  %517 = vmatmul.mubr.f32.gmra.mrb[0].mxu0 %v359
  %v518 = vpop.f32.mrb[0].mxu0
  %v519 = vadd.f32 %v262, %v518
  %v520 = vpop.f32.mrb[0].mxu0
  %521 = vmatprep.mubr.f32.mxu0 0.0
  %522 = vmatmul.mubr.f32.gmra.mrb[0].mxu0 %v362
  %v523 = vpop.f32.mrb[0].mxu0
  %v524 = vadd.f32 %v267, %v523
  %v525 = vpop.f32.mrb[0].mxu0
  %526 = vmatprep.mubr.f32.mxu0 0.0
  %527 = vmatmul.mubr.f32.gmra.mrb[0].mxu0 %v365
  %v528 = vpop.f32.mrb[0].mxu0
  %v529 = vadd.f32 %v272, %v528
  %v530 = vpop.f32.mrb[0].mxu0
  %531 = vmatprep.mubr.f32.mxu0 0.0
  %532 = vmatmul.mubr.f32.gmra.mrb[0].mxu0 %v368
  %v533 = vpop.f32.mrb[0].mxu0
  %v534 = vadd.f32 %v277, %v533
  %v535 = vpop.f32.mrb[0].mxu0
  %536 = vmatprep.mubr.f32.mxu0 0.0
  %537 = vmatmul.mubr.f32.gmra.mrb[0].mxu0 %v371
  %v538 = vpop.f32.mrb[0].mxu0
  %v539 = vadd.f32 %v282, %v538
  %v540 = vpop.f32.mrb[0].mxu0
  %541 = vmatprep.mubr.f32.mxu0 0.0
  %542 = vmatmul.mubr.f32.gmra.mrb[0].mxu0 %v374
  %v543 = vpop.f32.mrb[0].mxu0
  %v544 = vadd.f32 %v287, %v543
  %v545 = vpop.f32.mrb[0].mxu0
  %546 = vmatprep.mubr.f32.mxu0 0.0
  %547 = vmatmul.mubr.f32.gmra.mrb[0].mxu0 %v377
  %v548 = vpop.f32.mrb[0].mxu0
  %v549 = vadd.f32 %v292, %v548
  %v550 = vpop.f32.mrb[0].mxu0
  %551 = vmatprep.mubr.f32.mxu0 0.0
  %552 = vmatmul.mubr.f32.gmra.mrb[0].mxu0 %v380
  %v553 = vpop.f32.mrb[0].mxu0
  %v554 = vadd.f32 %v297, %v553
  %v555 = vpop.f32.mrb[0].mxu0
  %556 = vmatprep.mubr.f32.mxu0 0.0
  %557 = vmatmul.mubr.f32.gmra.mrb[0].mxu0 %v383
  %v558 = vpop.f32.mrb[0].mxu0
  %v559 = vadd.f32 %v302, %v558
  %v560 = vpop.f32.mrb[0].mxu0
  %561 = vmatprep.mubr.f32.mxu0 0.0
  %562 = vmatmul.mubr.f32.gmra.mrb[0].mxu0 %v386
  %v563 = vpop.f32.mrb[0].mxu0
  %v564 = vadd.f32 %v307, %v563
  %v565 = vpop.f32.mrb[0].mxu0
  %566 = vmatprep.mubr.f32.mxu0 0.0
  %567 = vmatmul.mubr.f32.gmra.mrb[0].mxu0 %v389
  %v568 = vpop.f32.mrb[0].mxu0
  %v569 = vadd.f32 %v312, %v568
  %v570 = vpop.f32.mrb[0].mxu0
  %571 = vmatprep.mubr.f32.mxu0 0.0
  %572 = vmatmul.mubr.f32.gmra.mrb[0].mxu0 %v392
  %v573 = vpop.f32.mrb[0].mxu0
  %v574 = vadd.f32 %v317, %v573
  %v575 = vpop.f32.mrb[0].mxu0
  %576 = vmatprep.mubr.f32.mxu0 0.0
  %577 = vmatmul.mubr.f32.gmra.mrb[0].mxu0 %v395
  %v578 = vpop.f32.mrb[0].mxu0
  %v579 = vadd.f32 %v322, %v578
  %v580 = vpop.f32.mrb[0].mxu0
  %581 = vdwg.mxu0
  %v582 = vld [vmem:[%s0 + $0x2] sm:$0xff]
  %v583 = vld [vmem:[%s0 + $0xa] sm:$0xff]
  %v584 = vld [vmem:[%s0 + $0x12] sm:$0xff]
  %v585 = vld [vmem:[%s0 + $0x1a] sm:$0xff]
  %v586 = vld [vmem:[%s0 + $0x22] sm:$0xff]
  %v587 = vld [vmem:[%s0 + $0x2a] sm:$0xff]
  %v588 = vld [vmem:[%s0 + $0x32] sm:$0xff]
  %v589 = vld [vmem:[%s0 + $0x3a] sm:$0xff]
  %v590 = vld [vmem:[%s0 + $0x42] sm:$0xff]
  %v591 = vld [vmem:[%s0 + $0x4a] sm:$0xff]
  %v592 = vld [vmem:[%s0 + $0x52] sm:$0xff]
  %v593 = vld [vmem:[%s0 + $0x5a] sm:$0xff]
  %v594 = vld [vmem:[%s0 + $0x62] sm:$0xff]
  %v595 = vld [vmem:[%s0 + $0x6a] sm:$0xff]
  %v596 = vld [vmem:[%s0 + $0x72] sm:$0xff]
  %v597 = vld [vmem:[%s0 + $0x7a] sm:$0xff]
  %v598 = vld [vmem:[%s0 + $0x82] sm:$0xff]
  %v599 = vld [vmem:[%s0 + $0x8a] sm:$0xff]
  %v600 = vld [vmem:[%s0 + $0x92] sm:$0xff]
  %v601 = vld [vmem:[%s0 + $0x9a] sm:$0xff]
  %v602 = vld [vmem:[%s0 + $0xa2] sm:$0xff]
  %v603 = vld [vmem:[%s0 + $0xaa] sm:$0xff]
  %v604 = vld [vmem:[%s0 + $0xb2] sm:$0xff]
  %v605 = vld [vmem:[%s0 + $0xba] sm:$0xff]
  %v606 = vld [vmem:[%s1 + $0x40] sm:$0xff]
  %v607 = vld [vmem:[%s1 + $0x48] sm:$0xff]
  %v608 = vld [vmem:[%s1 + $0x50] sm:$0xff]
  %v609 = vld [vmem:[%s1 + $0x58] sm:$0xff]
  %v611 = vsel %vm67, %v582, 0
  %v614 = vsel %vm67, %v583, 0
  %v617 = vsel %vm67, %v584, 0
  %v620 = vsel %vm67, %v585, 0
  %v623 = vsel %vm67, %v586, 0
  %v626 = vsel %vm67, %v587, 0
  %v629 = vsel %vm67, %v588, 0
  %v632 = vsel %vm67, %v589, 0
  %v635 = vsel %vm67, %v590, 0
  %v638 = vsel %vm67, %v591, 0
  %v641 = vsel %vm67, %v592, 0
  %v644 = vsel %vm67, %v593, 0
  %v647 = vsel %vm67, %v594, 0
  %v650 = vsel %vm67, %v595, 0
  %v653 = vsel %vm67, %v596, 0
  %v656 = vsel %vm67, %v597, 0
  %v659 = vsel %vm67, %v598, 0
  %v662 = vsel %vm67, %v599, 0
  %v665 = vsel %vm67, %v600, 0
  %v668 = vsel %vm67, %v601, 0
  %v671 = vsel %vm67, %v602, 0
  %v674 = vsel %vm67, %v603, 0
  %v677 = vsel %vm67, %v604, 0
  %v680 = vsel %vm67, %v605, 0
  %682 = vmatprep.subr.mxu0 0.0
  %683 = vmatpush1.msra.mxu0 %v606
  %684 = vmatprep.subr.mxu0 0.0
  %685 = vmatpush1.msra.mxu0 %v607
  %686 = vmatprep.subr.mxu0 0.0
  %687 = vmatpush1.msra.mxu0 %v608
  %688 = vmatprep.subr.mxu0 0.0
  %689 = vmatpush1.msra.mxu0 %v609
  %690 = vmatprep.subr.mxu0 0.0
  %691 = vmatpush1.msra.mxu0 0.0
  %692 = vmatprep.subr.mxu0 0.0
  %693 = vmatpush1.msra.mxu0 0.0
  %694 = vmatprep.subr.mxu0 0.0
  %695 = vmatpush1.msra.mxu0 0.0
  %696 = vmatprep.subr.mxu0 0.0
  %697 = vmatpush1.msra.mxu0 0.0
  %698 = vmatprep.subr.mxu0 0.0
  %699 = vmatpush1.msra.mxu0 0.0
  %700 = vmatprep.subr.mxu0 0.0
  %701 = vmatpush1.msra.mxu0 0.0
  %702 = vmatprep.subr.mxu0 0.0
  %703 = vmatpush1.msra.mxu0 0.0
  %704 = vmatprep.subr.mxu0 0.0
  %705 = vmatpush1.msra.mxu0 0.0
  %706 = vmatprep.subr.mxu0 0.0
  %707 = vmatpush1.msra.mxu0 0.0
  %708 = vmatprep.subr.mxu0 0.0
  %709 = vmatpush1.msra.mxu0 0.0
  %710 = vmatprep.subr.mxu0 0.0
  %711 = vmatpush1.msra.mxu0 0.0
  %712 = vmatprep.subr.mxu0 0.0
  %713 = vmatpush1.msra.mxu0 0.0
  %714 = vmatprep.subr.mxu0 0.0
  %715 = vmatpush1.msra.mxu0 0.0
  %716 = vmatprep.subr.mxu0 0.0
  %717 = vmatpush1.msra.mxu0 0.0
  %718 = vmatprep.subr.mxu0 0.0
  %719 = vmatpush1.msra.mxu0 0.0
  %720 = vmatprep.subr.mxu0 0.0
  %721 = vmatpush1.msra.mxu0 0.0
  %722 = vmatprep.subr.mxu0 0.0
  %723 = vmatpush1.msra.mxu0 0.0
  %724 = vmatprep.subr.mxu0 0.0
  %725 = vmatpush1.msra.mxu0 0.0
  %726 = vmatprep.subr.mxu0 0.0
  %727 = vmatpush1.msra.mxu0 0.0
  %728 = vmatprep.subr.mxu0 0.0
  %729 = vmatpush1.msra.mxu0 0.0
  %730 = vmatprep.subr.mxu0 0.0
  %731 = vmatpush1.msra.mxu0 0.0
  %732 = vmatprep.subr.mxu0 0.0
  %733 = vmatpush1.msra.mxu0 0.0
  %734 = vmatprep.subr.mxu0 0.0
  %735 = vmatpush1.msra.mxu0 0.0
  %736 = vmatprep.subr.mxu0 0.0
  %737 = vmatpush1.msra.mxu0 0.0
  %738 = vmatprep.subr.mxu0 0.0
  %739 = vmatpush1.msra.mxu0 0.0
  %740 = vmatprep.subr.mxu0 0.0
  %741 = vmatpush1.msra.mxu0 0.0
  %742 = vmatprep.subr.mxu0 0.0
  %743 = vmatpush1.msra.mxu0 0.0
  %744 = vmatprep.subr.mxu0 0.0
  %745 = vmatpush1.msra.mxu0 0.0
  %746 = vmatprep.mubr.f32.mxu0 0.0
  %747 = vmatmul.mubr.f32.gmra.mrb[0].mxu0 %v611
  %v748 = vpop.f32.mrb[0].mxu0
  %v749 = vadd.f32 0.0, %v748
  %v750 = vpop.f32.mrb[0].mxu0
  %751 = vmatprep.mubr.f32.mxu0 0.0
  %752 = vmatmul.mubr.f32.gmra.mrb[0].mxu0 %v614
  %v753 = vpop.f32.mrb[0].mxu0
  %v754 = vadd.f32 0.0, %v753
  %v755 = vpop.f32.mrb[0].mxu0
  %756 = vmatprep.mubr.f32.mxu0 0.0
  %757 = vmatmul.mubr.f32.gmra.mrb[0].mxu0 %v617
  %v758 = vpop.f32.mrb[0].mxu0
  %v759 = vadd.f32 0.0, %v758
  %v760 = vpop.f32.mrb[0].mxu0
  %761 = vmatprep.mubr.f32.mxu0 0.0
  %762 = vmatmul.mubr.f32.gmra.mrb[0].mxu0 %v620
  %v763 = vpop.f32.mrb[0].mxu0
  %v764 = vadd.f32 0.0, %v763
  %v765 = vpop.f32.mrb[0].mxu0
  %766 = vmatprep.mubr.f32.mxu0 0.0
  %767 = vmatmul.mubr.f32.gmra.mrb[0].mxu0 %v623
  %v768 = vpop.f32.mrb[0].mxu0
  %v769 = vadd.f32 0.0, %v768
  %v770 = vpop.f32.mrb[0].mxu0
  %771 = vmatprep.mubr.f32.mxu0 0.0
  %772 = vmatmul.mubr.f32.gmra.mrb[0].mxu0 %v626
  %v773 = vpop.f32.mrb[0].mxu0
  %v774 = vadd.f32 0.0, %v773
  %v775 = vpop.f32.mrb[0].mxu0
  %776 = vmatprep.mubr.f32.mxu0 0.0
  %777 = vmatmul.mubr.f32.gmra.mrb[0].mxu0 %v629
  %v778 = vpop.f32.mrb[0].mxu0
  %v779 = vadd.f32 0.0, %v778
  %v780 = vpop.f32.mrb[0].mxu0
  %781 = vmatprep.mubr.f32.mxu0 0.0
  %782 = vmatmul.mubr.f32.gmra.mrb[0].mxu0 %v632
  %v783 = vpop.f32.mrb[0].mxu0
  %v784 = vadd.f32 0.0, %v783
  %v785 = vpop.f32.mrb[0].mxu0
  %786 = vmatprep.mubr.f32.mxu0 0.0
  %787 = vmatmul.mubr.f32.gmra.mrb[0].mxu0 %v635
  %v788 = vpop.f32.mrb[0].mxu0
  %v789 = vadd.f32 0.0, %v788
  %v790 = vpop.f32.mrb[0].mxu0
  %791 = vmatprep.mubr.f32.mxu0 0.0
  %792 = vmatmul.mubr.f32.gmra.mrb[0].mxu0 %v638
  %v793 = vpop.f32.mrb[0].mxu0
  %v794 = vadd.f32 0.0, %v793
  %v795 = vpop.f32.mrb[0].mxu0
  %796 = vmatprep.mubr.f32.mxu0 0.0
  %797 = vmatmul.mubr.f32.gmra.mrb[0].mxu0 %v641
  %v798 = vpop.f32.mrb[0].mxu0
  %v799 = vadd.f32 0.0, %v798
  %v800 = vpop.f32.mrb[0].mxu0
  %801 = vmatprep.mubr.f32.mxu0 0.0
  %802 = vmatmul.mubr.f32.gmra.mrb[0].mxu0 %v644
  %v803 = vpop.f32.mrb[0].mxu0
  %v804 = vadd.f32 0.0, %v803
  %v805 = vpop.f32.mrb[0].mxu0
  %806 = vmatprep.mubr.f32.mxu0 0.0
  %807 = vmatmul.mubr.f32.gmra.mrb[0].mxu0 %v647
  %v808 = vpop.f32.mrb[0].mxu0
  %v809 = vadd.f32 0.0, %v808
  %v810 = vpop.f32.mrb[0].mxu0
  %811 = vmatprep.mubr.f32.mxu0 0.0
  %812 = vmatmul.mubr.f32.gmra.mrb[0].mxu0 %v650
  %v813 = vpop.f32.mrb[0].mxu0
  %v814 = vadd.f32 0.0, %v813
  %v815 = vpop.f32.mrb[0].mxu0
  %816 = vmatprep.mubr.f32.mxu0 0.0
  %817 = vmatmul.mubr.f32.gmra.mrb[0].mxu0 %v653
  %v818 = vpop.f32.mrb[0].mxu0
  %v819 = vadd.f32 0.0, %v818
  %v820 = vpop.f32.mrb[0].mxu0
  %821 = vmatprep.mubr.f32.mxu0 0.0
  %822 = vmatmul.mubr.f32.gmra.mrb[0].mxu0 %v656
  %v823 = vpop.f32.mrb[0].mxu0
  %v824 = vadd.f32 0.0, %v823
  %v825 = vpop.f32.mrb[0].mxu0
  %826 = vmatprep.mubr.f32.mxu0 0.0
  %827 = vmatmul.mubr.f32.gmra.mrb[0].mxu0 %v659
  %v828 = vpop.f32.mrb[0].mxu0
  %v829 = vadd.f32 0.0, %v828
  %v830 = vpop.f32.mrb[0].mxu0
  %831 = vmatprep.mubr.f32.mxu0 0.0
  %832 = vmatmul.mubr.f32.gmra.mrb[0].mxu0 %v662
  %v833 = vpop.f32.mrb[0].mxu0
  %v834 = vadd.f32 0.0, %v833
  %v835 = vpop.f32.mrb[0].mxu0
  %836 = vmatprep.mubr.f32.mxu0 0.0
  %837 = vmatmul.mubr.f32.gmra.mrb[0].mxu0 %v665
  %v838 = vpop.f32.mrb[0].mxu0
  %v839 = vadd.f32 0.0, %v838
  %v840 = vpop.f32.mrb[0].mxu0
  %841 = vmatprep.mubr.f32.mxu0 0.0
  %842 = vmatmul.mubr.f32.gmra.mrb[0].mxu0 %v668
  %v843 = vpop.f32.mrb[0].mxu0
  %v844 = vadd.f32 0.0, %v843
  %v845 = vpop.f32.mrb[0].mxu0
  %846 = vmatprep.mubr.f32.mxu0 0.0
  %847 = vmatmul.mubr.f32.gmra.mrb[0].mxu0 %v671
  %v848 = vpop.f32.mrb[0].mxu0
  %v849 = vadd.f32 0.0, %v848
  %v850 = vpop.f32.mrb[0].mxu0
  %851 = vmatprep.mubr.f32.mxu0 0.0
  %852 = vmatmul.mubr.f32.gmra.mrb[0].mxu0 %v674
  %v853 = vpop.f32.mrb[0].mxu0
  %v854 = vadd.f32 0.0, %v853
  %v855 = vpop.f32.mrb[0].mxu0
  %856 = vmatprep.mubr.f32.mxu0 0.0
  %857 = vmatmul.mubr.f32.gmra.mrb[0].mxu0 %v677
  %v858 = vpop.f32.mrb[0].mxu0
  %v859 = vadd.f32 0.0, %v858
  %v860 = vpop.f32.mrb[0].mxu0
  %861 = vmatprep.mubr.f32.mxu0 0.0
  %862 = vmatmul.mubr.f32.gmra.mrb[0].mxu0 %v680
  %v863 = vpop.f32.mrb[0].mxu0
  %v864 = vadd.f32 0.0, %v863
  %v865 = vpop.f32.mrb[0].mxu0
  %866 = vdwg.mxu0
  %v867 = vadd.f32 %v464, %v749
  %v868 = vadd.f32 %v469, %v754
  %v869 = vadd.f32 %v474, %v759
  %v870 = vadd.f32 %v479, %v764
  %v871 = vadd.f32 %v484, %v769
  %v872 = vadd.f32 %v489, %v774
  %v873 = vadd.f32 %v494, %v779
  %v874 = vadd.f32 %v499, %v784
  %v875 = vadd.f32 %v504, %v789
  %v876 = vadd.f32 %v509, %v794
  %v877 = vadd.f32 %v514, %v799
  %v878 = vadd.f32 %v519, %v804
  %v879 = vadd.f32 %v524, %v809
  %v880 = vadd.f32 %v529, %v814
  %v881 = vadd.f32 %v534, %v819
  %v882 = vadd.f32 %v539, %v824
  %v883 = vadd.f32 %v544, %v829
  %v884 = vadd.f32 %v549, %v834
  %v885 = vadd.f32 %v554, %v839
  %v886 = vadd.f32 %v559, %v844
  %v887 = vadd.f32 %v564, %v849
  %v888 = vadd.f32 %v569, %v854
  %v889 = vadd.f32 %v574, %v859
  %v890 = vadd.f32 %v579, %v864
  %v891 = vlaneseq
  %v892 = vshrl.u32 %v891, 7
  %v893 = vadd.s32 %v892, 8
  %v894 = vadd.s32 %v892, 16
  %v895 = vlaneseq
  %v896 = vand.u32 %v895, 127
  %vm897 = vcmp.ge.s32.totalorder %v896, 8
  %vm898 = vcmp.lt.s32.totalorder %v896, 24
  %vm899 = vmand %vm897, %vm898
  %v900 = vsel %vm899, 14, 15
  %vm901 = vcmp.ge.s32.totalorder %v892, %v900
  %vm902 = vcmp.ge.s32.totalorder %v893, %v900
  %vm903 = vcmp.ge.s32.totalorder %v894, %v900
  %v904 = vsel %vm901, -1e+30, 0.0
  %v905 = vsel %vm902, -1e+30, 0.0
  %v906 = vsel %vm903, -1e+30, 0.0
  %v907 = vadd.f32 %v867, %v904
  %v908 = vadd.f32 %v868, %v905
  %v909 = vadd.f32 %v869, %v906
  %v910 = vadd.f32 %v870, %v904
  %v911 = vadd.f32 %v871, %v905
  %v912 = vadd.f32 %v872, %v906
  %v913 = vadd.f32 %v873, %v904
  %v914 = vadd.f32 %v874, %v905
  %v915 = vadd.f32 %v875, %v906
  %v916 = vadd.f32 %v876, %v904
  %v917 = vadd.f32 %v877, %v905
  %v918 = vadd.f32 %v878, %v906
  %v919 = vadd.f32 %v879, %v904
  %v920 = vadd.f32 %v880, %v905
  %v921 = vadd.f32 %v881, %v906
  %v922 = vadd.f32 %v882, %v904
  %v923 = vadd.f32 %v883, %v905
  %v924 = vadd.f32 %v884, %v906
  %v925 = vadd.f32 %v885, %v904
  %v926 = vadd.f32 %v886, %v905
  %v927 = vadd.f32 %v887, %v906
  %v928 = vadd.f32 %v888, %v904
  %v929 = vadd.f32 %v889, %v905
  %v930 = vadd.f32 %v890, %v906
  %v931 = vmax.f32 %v907, %v908
  %v932 = vmax.f32 %v931, %v909
  %v933 = vrot.slane %v932, 4
  %v934 = vmax.f32 %v932, %v933
  %v935 = vrot.slane %v934, 2
  %v936 = vmax.f32 %v934, %v935
  %v937 = vrot.slane %v936, 1
  %v938 = vmax.f32 %v936, %v937
  %v939 = vmax.f32 %v910, %v911
  %v940 = vmax.f32 %v939, %v912
  %v941 = vrot.slane %v940, 4
  %v942 = vmax.f32 %v940, %v941
  %v943 = vrot.slane %v942, 2
  %v944 = vmax.f32 %v942, %v943
  %v945 = vrot.slane %v944, 1
  %v946 = vmax.f32 %v944, %v945
  %v947 = vmax.f32 %v913, %v914
  %v948 = vmax.f32 %v947, %v915
  %v949 = vrot.slane %v948, 4
  %v950 = vmax.f32 %v948, %v949
  %v951 = vrot.slane %v950, 2
  %v952 = vmax.f32 %v950, %v951
  %v953 = vrot.slane %v952, 1
  %v954 = vmax.f32 %v952, %v953
  %v955 = vmax.f32 %v916, %v917
  %v956 = vmax.f32 %v955, %v918
  %v957 = vrot.slane %v956, 4
  %v958 = vmax.f32 %v956, %v957
  %v959 = vrot.slane %v958, 2
  %v960 = vmax.f32 %v958, %v959
  %v961 = vrot.slane %v960, 1
  %v962 = vmax.f32 %v960, %v961
  %v963 = vmax.f32 %v919, %v920
  %v964 = vmax.f32 %v963, %v921
  %v965 = vrot.slane %v964, 4
  %v966 = vmax.f32 %v964, %v965
  %v967 = vrot.slane %v966, 2
  %v968 = vmax.f32 %v966, %v967
  %v969 = vrot.slane %v968, 1
  %v970 = vmax.f32 %v968, %v969
  %v971 = vmax.f32 %v922, %v923
  %v972 = vmax.f32 %v971, %v924
  %v973 = vrot.slane %v972, 4
  %v974 = vmax.f32 %v972, %v973
  %v975 = vrot.slane %v974, 2
  %v976 = vmax.f32 %v974, %v975
  %v977 = vrot.slane %v976, 1
  %v978 = vmax.f32 %v976, %v977
  %v979 = vmax.f32 %v925, %v926
  %v980 = vmax.f32 %v979, %v927
  %v981 = vrot.slane %v980, 4
  %v982 = vmax.f32 %v980, %v981
  %v983 = vrot.slane %v982, 2
  %v984 = vmax.f32 %v982, %v983
  %v985 = vrot.slane %v984, 1
  %v986 = vmax.f32 %v984, %v985
  %v987 = vmax.f32 %v928, %v929
  %v988 = vmax.f32 %v987, %v930
  %v989 = vrot.slane %v988, 4
  %v990 = vmax.f32 %v988, %v989
  %v991 = vrot.slane %v990, 2
  %v992 = vmax.f32 %v990, %v991
  %v993 = vrot.slane %v992, 1
  %v994 = vmax.f32 %v992, %v993
  %v995 = vld [vmem:[%s1 + $0x60] sm:$0x1]
  %v996 = vlaneseq
  %v997 = vshrl.u32 %v996, 7
  %v998 = vsub.s32 0, %v997
  %v999 = vrot.slane %v995, %v998
  %v1000 = vadd.f32 %v938, %v999
  %v1001 = vadd.f32 %v946, %v999
  %v1002 = vadd.f32 %v954, %v999
  %v1003 = vadd.f32 %v962, %v999
  %v1004 = vadd.f32 %v970, %v999
  %v1005 = vadd.f32 %v978, %v999
  %v1006 = vadd.f32 %v986, %v999
  %v1007 = vadd.f32 %v994, %v999
  %v1008 = vmax.f32 %v1000, 0.0
  %v1009 = vmax.f32 %v1001, 0.0
  %v1010 = vmax.f32 %v1002, 0.0
  %v1011 = vmax.f32 %v1003, 0.0
  %v1012 = vmax.f32 %v1004, 0.0
  %v1013 = vmax.f32 %v1005, 0.0
  %v1014 = vmax.f32 %v1006, 0.0
  %v1015 = vmax.f32 %v1007, 0.0
  %vm1016 = vcmp.eq.s32.totalorder %v896, 127
  %v1025 = vrot.slane %v1009, 7
  %vm1026 = vcmask 1041409
  %v1027 = vsel %vm1026, %v1025, %v1008
  %v1028 = vrot.slane %v1010, 6
  %vm1029 = vcmask 1042434
  %v1030 = vsel %vm1029, %v1028, %v1027
  %v1031 = vrot.slane %v1011, 5
  %vm1032 = vcmask 1043459
  %v1033 = vsel %vm1032, %v1031, %v1030
  %v1034 = vrot.slane %v1012, 4
  %vm1035 = vcmask 1044484
  %v1036 = vsel %vm1035, %v1034, %v1033
  %v1037 = vrot.slane %v1013, 3
  %vm1038 = vcmask 1045509
  %v1039 = vsel %vm1038, %v1037, %v1036
  %v1040 = vrot.slane %v1014, 2
  %vm1041 = vcmask 1046534
  %v1042 = vsel %vm1041, %v1040, %v1039
  %v1043 = vrot.slane %v1015, 1
  %vm1044 = vcmask 1047559
  %v1045 = vsel %vm1044, %v1043, %v1042
  %v1047 = vsel %vm1016, 1.0, %v1045
  %v1048 = vld [vmem:[%s1 + $0x68] sm:$0xff]
  %v1049 = vld [vmem:[%s1 + $0x70] sm:$0xff]
  %v1050 = vld [vmem:[%s1 + $0x78] sm:$0xff]
  %v1051 = vld [vmem:[%s1 + $0x80] sm:$0xff]
  %v1052 = vld [vmem:[%s1 + $0x88] sm:$0xff]
  %v1053 = vld [vmem:[%s1 + $0x90] sm:$0xff]
  %v1054 = vld [vmem:[%s1 + $0x98] sm:$0xff]
  %v1055 = vld [vmem:[%s1 + $0xa0] sm:$0xff]
  %v1056 = vld [vmem:[%s1 + $0xa8] sm:$0xff]
  %v1057 = vld [vmem:[%s1 + $0xb0] sm:$0xff]
  %v1058 = vld [vmem:[%s1 + $0xb8] sm:$0xff]
  %v1059 = vld [vmem:[%s1 + $0xc0] sm:$0xff]
  %v1060 = vld [vmem:[%s1 + $0xc8] sm:$0xff]
  %v1061 = vld [vmem:[%s1 + $0xd0] sm:$0xff]
  %v1062 = vld [vmem:[%s1 + $0xd8] sm:$0xff]
  %v1063 = vld [vmem:[%s1 + $0xe0] sm:$0xff]
  %1064 = vmatprep.subr.mxu0 0.0
  %1065 = vmatpush1.msra.mxu0 %v1048
  %1066 = vmatprep.subr.mxu0 0.0
  %1067 = vmatpush1.msra.mxu0 %v1049
  %1068 = vmatprep.subr.mxu0 0.0
  %1069 = vmatpush1.msra.mxu0 %v1050
  %1070 = vmatprep.subr.mxu0 0.0
  %1071 = vmatpush1.msra.mxu0 %v1051
  %1072 = vmatprep.subr.mxu0 0.0
  %1073 = vmatpush1.msra.mxu0 %v1052
  %1074 = vmatprep.subr.mxu0 0.0
  %1075 = vmatpush1.msra.mxu0 %v1053
  %1076 = vmatprep.subr.mxu0 0.0
  %1077 = vmatpush1.msra.mxu0 %v1054
  %1078 = vmatprep.subr.mxu0 0.0
  %1079 = vmatpush1.msra.mxu0 %v1055
  %1080 = vmatprep.subr.mxu0 0.0
  %1081 = vmatpush1.msra.mxu0 %v1056
  %1082 = vmatprep.subr.mxu0 0.0
  %1083 = vmatpush1.msra.mxu0 %v1057
  %1084 = vmatprep.subr.mxu0 0.0
  %1085 = vmatpush1.msra.mxu0 %v1058
  %1086 = vmatprep.subr.mxu0 0.0
  %1087 = vmatpush1.msra.mxu0 %v1059
  %1088 = vmatprep.subr.mxu0 0.0
  %1089 = vmatpush1.msra.mxu0 %v1060
  %1090 = vmatprep.subr.mxu0 0.0
  %1091 = vmatpush1.msra.mxu0 %v1061
  %1092 = vmatprep.subr.mxu0 0.0
  %1093 = vmatpush1.msra.mxu0 %v1062
  %1094 = vmatprep.subr.mxu0 0.0
  %1095 = vmatpush1.msra.mxu0 %v1063
  %1096 = vmatprep.subr.mxu0 0.0
  %1097 = vmatpush1.msra.mxu0 0.0
  %1098 = vmatprep.subr.mxu0 0.0
  %1099 = vmatpush1.msra.mxu0 0.0
  %1100 = vmatprep.subr.mxu0 0.0
  %1101 = vmatpush1.msra.mxu0 0.0
  %1102 = vmatprep.subr.mxu0 0.0
  %1103 = vmatpush1.msra.mxu0 0.0
  %1104 = vmatprep.subr.mxu0 0.0
  %1105 = vmatpush1.msra.mxu0 0.0
  %1106 = vmatprep.subr.mxu0 0.0
  %1107 = vmatpush1.msra.mxu0 0.0
  %1108 = vmatprep.subr.mxu0 0.0
  %1109 = vmatpush1.msra.mxu0 0.0
  %1110 = vmatprep.subr.mxu0 0.0
  %1111 = vmatpush1.msra.mxu0 0.0
  %1112 = vmatprep.subr.mxu0 0.0
  %1113 = vmatpush1.msra.mxu0 0.0
  %1114 = vmatprep.subr.mxu0 0.0
  %1115 = vmatpush1.msra.mxu0 0.0
  %1116 = vmatprep.subr.mxu0 0.0
  %1117 = vmatpush1.msra.mxu0 0.0
  %1118 = vmatprep.subr.mxu0 0.0
  %1119 = vmatpush1.msra.mxu0 0.0
  %1120 = vmatprep.subr.mxu0 0.0
  %1121 = vmatpush1.msra.mxu0 0.0
  %1122 = vmatprep.subr.mxu0 0.0
  %1123 = vmatpush1.msra.mxu0 0.0
  %1124 = vmatprep.subr.mxu0 0.0
  %1125 = vmatpush1.msra.mxu0 0.0
  %1126 = vmatprep.subr.mxu0 0.0
  %1127 = vmatpush1.msra.mxu0 0.0
  %1128 = vmatprep.mubr.f32.mxu0 0.0
  %1129 = vmatmul.mubr.f32.gmra.mrb[0].mxu0 %v1047
  %v1130 = vpop.f32.mrb[0].mxu0
  %v1131 = vadd.f32 0.0, %v1130
  %v1132 = vpop.f32.mrb[0].mxu0
  %1133 = vdwg.mxu0
  %1134 = vst [vmem:[%s2] sm:$0xff] %v1131
  // Predicated region
  $region10: #{textcnn_forward.1} parent=0 // pred_check
    _
  $region11: #{textcnn_forward.1} parent=0 // pred_check_branch
    %1136 = sbr.rel (0) target = $region13
  $region12: #{textcnn_forward.1} parent=0 // pred_region
    _
  $region13: #{textcnn_forward.1} parent=0 // pred_fallthru
    _
  // Predicated region
  $region14: #{textcnn_forward.1} parent=0 // pred_check
    _
  $region15: #{textcnn_forward.1} parent=0 // pred_check_branch
    %1138 = sbr.rel (0) target = $region17
  $region16: #{textcnn_forward.1} parent=0 // pred_region
    _
  $region17: #{textcnn_forward.1} parent=0 // pred_fallthru
    _

</llo_original>
